<compile_context>
chip_gen: v6e
topology: v6e:2x2x1
jax: 0.10.0
libtpu: 0.0.40
codegen_flags: <defaults>
</compile_context>

<pallas_src>
import functools
import math

import jax
import jax.numpy as jnp
from jax.experimental import pallas as pl
from jax.experimental.pallas import tpu as pltpu


def _round_up(x, m):
    return ((x + m - 1) // m) * m


def _pad2(x, rows, cols):
    r, c = x.shape
    return jnp.pad(x, ((0, rows - r), (0, cols - c)))


_COMPILER_PARAMS_2D = pltpu.CompilerParams(
    dimension_semantics=("parallel", "arbitrary"),
    vmem_limit_bytes=32 * 1024 * 1024,
)


# ---------------------------------------------------------------------------
# Layer 1 (+ fused pre-projection for layer 2):
#   P = ReLU( (A @ streamed) @ W_post + b1 ) @ (W2 / T)            [N, Cpad]
#     streamed = X        , W_post = W1       when Fpad <= Hpad
#     streamed = X @ W1   , W_post = I_Hpad   otherwise
# ---------------------------------------------------------------------------
def _gcn_layer1_kernel(a_ref, p_ref, wpost_ref, b1_ref, w2_ref, o_ref, acc_ref):
    k = pl.program_id(1)

    @pl.when(k == 0)
    def _():
        acc_ref[...] = jnp.zeros_like(acc_ref)

    # acc += A_tile @ streamed_tile   (bf16 operands, f32 accumulation on MXU)
    acc_ref[...] += jnp.dot(a_ref[...], p_ref[...],
                            preferred_element_type=jnp.float32)

    @pl.when(k == pl.num_programs(1) - 1)
    def _():
        h = jnp.dot(acc_ref[...].astype(jnp.bfloat16), wpost_ref[...],
                    preferred_element_type=jnp.float32) + b1_ref[...]
        h = jnp.maximum(h, 0.0)          # ReLU  (dropout: identity in eval mode)
        # Pre-project h @ (W2/T) so layer 2 only streams an [N, Cpad] operand.
        o_ref[...] = jnp.dot(h.astype(jnp.bfloat16), w2_ref[...],
                             preferred_element_type=jnp.float32
                             ).astype(o_ref.dtype)


# ---------------------------------------------------------------------------
# Layer 2: out = log_softmax( A @ P + b2/T ) over the first `num_classes` lanes
# ---------------------------------------------------------------------------
def _gcn_layer2_kernel(a_ref, p_ref, b2_ref, o_ref, acc_ref, *, num_classes):
    k = pl.program_id(1)

    @pl.when(k == 0)
    def _():
        acc_ref[...] = jnp.zeros_like(acc_ref)

    acc_ref[...] += jnp.dot(a_ref[...], p_ref[...],
                            preferred_element_type=jnp.float32)

    @pl.when(k == pl.num_programs(1) - 1)
    def _():
        z = acc_ref[...] + b2_ref[...]
        # mask padded class lanes out of the softmax
        col = jax.lax.broadcasted_iota(jnp.int32, z.shape, 1)
        z = jnp.where(col < num_classes, z, jnp.float32(-1e30))
        m = jnp.max(z, axis=1, keepdims=True)
        s = z - m
        lse = jnp.log(jnp.sum(jnp.exp(s), axis=1, keepdims=True))
        o_ref[...] = s - lse


# ---------------------------------------------------------------------------
# Row-tiled projection x @ w (used only when Fpad > Hpad, e.g. Cora-style inputs)
# ---------------------------------------------------------------------------
def _project_kernel(x_ref, w_ref, o_ref):
    o_ref[...] = jnp.dot(x_ref[...], w_ref[...],
                         preferred_element_type=jnp.float32).astype(o_ref.dtype)


def _row_project(x_p, w_p, tm):
    npad, fp = x_p.shape
    hp = w_p.shape[1]
    return pl.pallas_call(
        _project_kernel,
        out_shape=jax.ShapeDtypeStruct((npad, hp), jnp.bfloat16),
        grid=(npad // tm,),
        in_specs=[pl.BlockSpec((tm, fp), lambda i: (i, 0)),
                  pl.BlockSpec((fp, hp), lambda i: (0, 0))],
        out_specs=pl.BlockSpec((tm, hp), lambda i: (i, 0)),
        compiler_params=pltpu.CompilerParams(
            dimension_semantics=("parallel",),
            vmem_limit_bytes=32 * 1024 * 1024),
    )(x_p, w_p)


def gcn_forward(a_hat, x, w1, b1, w2, b2, T=1.0, *, tm=256, tk=512):
    """Forward pass of the 2-layer GCN on a dense normalized adjacency."""
    assert tm % 8 == 0 and tk % 128 == 0
    n, f = x.shape
    h_dim = w1.shape[1]
    c_dim = w2.shape[1]

    fp = _round_up(f, 128)
    hp = _round_up(h_dim, 128)
    cp = _round_up(c_dim, 128)
    npad = _round_up(n, math.lcm(tm, tk))

    inv_t = 1.0 / float(T)

    a_p = _pad2(a_hat.astype(jnp.float32), npad, npad).astype(jnp.bfloat16)
    x_p = _pad2(x.astype(jnp.float32), npad, fp).astype(jnp.bfloat16)
    w1_p = _pad2(w1.astype(jnp.float32), fp, hp)
    b1_p = _pad2(b1.astype(jnp.float32), 1, hp)
    w2_p = _pad2(w2.astype(jnp.float32), hp, cp) * inv_t    # fold 1/T into W2
    b2_p = _pad2(b2.astype(jnp.float32), 1, cp) * inv_t     # fold 1/T into b2

    # Static association choice for layer 1: stream the narrower operand over A.
    if fp <= hp:
        streamed = x_p                                   # (A @ X) @ W1
        w_post = w1_p.astype(jnp.bfloat16)
    else:
        streamed = _row_project(x_p, w1_p.astype(jnp.bfloat16), tm)  # A @ (X @ W1)
        w_post = jnp.eye(hp, dtype=jnp.bfloat16)
    d_stream = streamed.shape[1]

    grid = (npad // tm, npad // tk)

    # ---- layer 1 (+ fused h @ (W2/T) pre-projection) ----------------------
    p2 = pl.pallas_call(
        _gcn_layer1_kernel,
        out_shape=jax.ShapeDtypeStruct((npad, cp), jnp.bfloat16),
        grid=grid,
        in_specs=[
            pl.BlockSpec((tm, tk), lambda i, k: (i, k)),          # A tile
            pl.BlockSpec((tk, d_stream), lambda i, k: (k, 0)),    # streamed operand
            pl.BlockSpec((d_stream, hp), lambda i, k: (0, 0)),    # W_post (resident)
            pl.BlockSpec((1, hp), lambda i, k: (0, 0)),           # b1
            pl.BlockSpec((hp, cp), lambda i, k: (0, 0)),          # W2 / T
        ],
        out_specs=pl.BlockSpec((tm, cp), lambda i, k: (i, 0)),
        scratch_shapes=[pltpu.VMEM((tm, d_stream), jnp.float32)],
        compiler_params=_COMPILER_PARAMS_2D,
    )(a_p, streamed, w_post, b1_p, w2_p.astype(jnp.bfloat16))

    # ---- layer 2 aggregation + log_softmax ---------------------------------
    out_p = pl.pallas_call(
        functools.partial(_gcn_layer2_kernel, num_classes=c_dim),
        out_shape=jax.ShapeDtypeStruct((npad, cp), jnp.float32),
        grid=grid,
        in_specs=[
            pl.BlockSpec((tm, tk), lambda i, k: (i, k)),          # A tile
            pl.BlockSpec((tk, cp), lambda i, k: (k, 0)),          # P tile
            pl.BlockSpec((1, cp), lambda i, k: (0, 0)),           # b2 / T
        ],
        out_specs=pl.BlockSpec((tm, cp), lambda i, k: (i, 0)),
        scratch_shapes=[pltpu.VMEM((tm, cp), jnp.float32)],
        compiler_params=_COMPILER_PARAMS_2D,
    )(a_p, p2, b2_p)

    return out_p[:n, :c_dim]


# ---------------------------------------------------------------------------
# Host-side helpers (graph preprocessing, init, f32 reference)
# ---------------------------------------------------------------------------
def build_norm_adj(edge_index, edge_weight, num_nodes):
    """Dense D^-1/2 (A + I) D^-1/2 from a [2, E] edge_index (PyG GCNConv default)."""
    if edge_weight is None:
        edge_weight = jnp.ones((edge_index.shape[1],), dtype=jnp.float32)
    A = jnp.zeros((num_nodes, num_nodes), dtype=jnp.float32)
    A = A.at[edge_index[0], edge_index[1]].add(edge_weight)
    A = A + jnp.eye(num_nodes, dtype=jnp.float32)   # add self loops (fill_value=1)
    deg = A.sum(axis=1)
    dinv = jnp.where(deg > 0, jax.lax.rsqrt(deg), 0.0)
    return dinv[:, None] * A * dinv[None, :]


def glorot(key, shape):
    fan_in, fan_out = shape
    limit = (6.0 / (fan_in + fan_out)) ** 0.5
    return jax.random.uniform(key, shape, jnp.float32, -limit, limit)


def gcn_reference(a_hat, x, w1, b1, w2, b2, T=1.0):
    h = jnp.maximum(a_hat @ (x @ w1) + b1, 0.0)
    z = (a_hat @ (h @ w2) + b2) / T
    return jax.nn.log_softmax(z, axis=1)


if __name__ == "__main__":
    # Small shapes consistent with the module: N nodes, in_dim -> hid_dim -> out_dim.
    N, IN_DIM, HID_DIM, OUT_DIM = 200, 8, 32, 8
    E = 800

    key = jax.random.PRNGKey(0)
    k_x, k_src, k_dst, k_w1, k_w2 = jax.random.split(key, 5)

    x = jax.random.normal(k_x, (N, IN_DIM), dtype=jnp.float32)
    src = jax.random.randint(k_src, (E,), 0, N)
    dst = jax.random.randint(k_dst, (E,), 0, N)
    edge_index = jnp.stack([src, dst], axis=0)  # [2, E]

    # deterministic parameter init (GCNConv: glorot weight, zero bias)
    w1 = glorot(k_w1, (IN_DIM, HID_DIM))
    b1 = jnp.zeros((1, HID_DIM), jnp.float32)
    w2 = glorot(k_w2, (HID_DIM, OUT_DIM))
    b2 = jnp.zeros((1, OUT_DIM), jnp.float32)

    a_hat = build_norm_adj(edge_index, None, N)

    # Small tiles for the demo so the grid has multiple row tiles AND multiple
    # reduction (k) steps; production defaults are tm=256, tk=512.
    out = gcn_forward(a_hat, x, w1, b1, w2, b2, T=1.0, tm=64, tk=128)
    jax.block_until_ready(out)

    # validate against a pure-f32 JAX reference (kernel uses bf16 matmul operands)
    ref = gcn_reference(a_hat, x, w1, b1, w2, b2, T=1.0)

    assert out.shape == (N, OUT_DIM)
    row_sums = jnp.exp(out).sum(axis=1)
    assert bool(jnp.allclose(row_sums, 1.0, atol=1e-3))
    max_err = float(jnp.max(jnp.abs(out - ref)))
    assert max_err < 1e-1, max_err

    print("KERNEL_OK")
</pallas_src>

<mosaic_0001>
module attributes {stable_mosaic.version = 11 : i64} {
  func.func @_gcn_layer1_kernel(%arg0: i32, %arg1: i32, %arg2: memref<64x128xbf16, #tpu.memory_space<vmem>>, %arg3: memref<128x128xbf16, #tpu.memory_space<vmem>>, %arg4: memref<128x128xbf16, #tpu.memory_space<vmem>>, %arg5: memref<1x128xf32, #tpu.memory_space<vmem>>, %arg6: memref<128x128xbf16, #tpu.memory_space<vmem>>, %arg7: memref<64x128xbf16, #tpu.memory_space<vmem>>, %arg8: memref<64x128xf32, #tpu.memory_space<vmem>>) attributes {dimension_semantics = [#tpu.dimension_semantics<parallel>, #tpu.dimension_semantics<arbitrary>], iteration_bounds = array<i64: 4, 2>, scalar_prefetch = 0 : i64, scratch_operands = 1 : i64, tpu.core_type = #tpu.core_type<tc>, window_params = [{transform_indices = @transform_0, window_bounds = array<i64: 64, 128>}, {transform_indices = @transform_1, window_bounds = array<i64: 128, 128>}, {pipeline_mode = #tpu.pipeline_mode<synchronous>, transform_indices = @transform_2, window_bounds = array<i64: 128, 128>}, {pipeline_mode = #tpu.pipeline_mode<synchronous>, transform_indices = @transform_3, window_bounds = array<i64: 1, 128>}, {pipeline_mode = #tpu.pipeline_mode<synchronous>, transform_indices = @transform_4, window_bounds = array<i64: 128, 128>}, {transform_indices = @transform_5, window_bounds = array<i64: 64, 128>}]} {
    %c0_i32 = arith.constant 0 : i32
    %0 = arith.cmpi eq, %arg1, %c0_i32 : i32
    %1 = arith.extui %0 : i1 to i32
    %c0_i32_0 = arith.constant 0 : i32
    %2 = arith.cmpi ne, %1, %c0_i32_0 : i32
    scf.if %2 {
      %cst_9 = arith.constant 0.000000e+00 : f32
      %12 = vector.broadcast %cst_9 : f32 to vector<64x128xf32>
      %c0_10 = arith.constant 0 : index
      %c0_11 = arith.constant 0 : index
      %13 = vector.load %arg8[%c0_10, %c0_11] : memref<64x128xf32, #tpu.memory_space<vmem>>, vector<64x128xf32>
      tpu.vector_store %arg8[%c0_10, %c0_11], %12 {strides = array<i32>} : memref<64x128xf32, #tpu.memory_space<vmem>>, vector<64x128xf32>,
    } else {
    }
    %c0 = arith.constant 0 : index
    %c0_1 = arith.constant 0 : index
    %3 = vector.load %arg8[%c0, %c0_1] : memref<64x128xf32, #tpu.memory_space<vmem>>, vector<64x128xf32>
    %c0_2 = arith.constant 0 : index
    %c0_3 = arith.constant 0 : index
    %4 = vector.load %arg2[%c0_2, %c0_3] : memref<64x128xbf16, #tpu.memory_space<vmem>>, vector<64x128xbf16>
    %c0_4 = arith.constant 0 : index
    %c0_5 = arith.constant 0 : index
    %5 = vector.load %arg3[%c0_4, %c0_5] : memref<128x128xbf16, #tpu.memory_space<vmem>>, vector<128x128xbf16>
    %cst = arith.constant dense<0.000000e+00> : vector<64x128xf32>
    %6 = tpu.matmul %4, %5, %cst {dimension_numbers = #tpu.dot_dimension_numbers<[1], [0], [0], [1], [0, 0, 1, 1], [], []>} : vector<64x128xbf16>, vector<128x128xbf16>, vector<64x128xf32> -> vector<64x128xf32>
    %7 = arith.addf %3, %6 : vector<64x128xf32>
    %c0_6 = arith.constant 0 : index
    %c0_7 = arith.constant 0 : index
    %8 = vector.load %arg8[%c0_6, %c0_7] : memref<64x128xf32, #tpu.memory_space<vmem>>, vector<64x128xf32>
    tpu.vector_store %arg8[%c0_6, %c0_7], %7 {strides = array<i32>} : memref<64x128xf32, #tpu.memory_space<vmem>>, vector<64x128xf32>,
    %c1_i32 = arith.constant 1 : i32
    %9 = arith.cmpi eq, %arg1, %c1_i32 : i32
    %10 = arith.extui %9 : i1 to i32
    %c0_i32_8 = arith.constant 0 : i32
    %11 = arith.cmpi ne, %10, %c0_i32_8 : i32
    scf.if %11 {
      %c0_9 = arith.constant 0 : index
      %c0_10 = arith.constant 0 : index
      %12 = vector.load %arg8[%c0_9, %c0_10] : memref<64x128xf32, #tpu.memory_space<vmem>>, vector<64x128xf32>
      %13 = arith.truncf %12 : vector<64x128xf32> to vector<64x128xbf16>
      %c0_11 = arith.constant 0 : index
      %c0_12 = arith.constant 0 : index
      %14 = vector.load %arg4[%c0_11, %c0_12] : memref<128x128xbf16, #tpu.memory_space<vmem>>, vector<128x128xbf16>
      %cst_13 = arith.constant dense<0.000000e+00> : vector<64x128xf32>
      %15 = tpu.matmul %13, %14, %cst_13 {dimension_numbers = #tpu.dot_dimension_numbers<[1], [0], [0], [1], [0, 0, 1, 1], [], []>} : vector<64x128xbf16>, vector<128x128xbf16>, vector<64x128xf32> -> vector<64x128xf32>
      %c0_14 = arith.constant 0 : index
      %c0_15 = arith.constant 0 : index
      %16 = vector.load %arg5[%c0_14, %c0_15] : memref<1x128xf32, #tpu.memory_space<vmem>>, vector<1x128xf32>
      %17 = vector.broadcast %16 : vector<1x128xf32> to vector<64x128xf32>
      %18 = arith.addf %15, %17 : vector<64x128xf32>
      %cst_16 = arith.constant 0.000000e+00 : f32
      %19 = vector.broadcast %cst_16 : f32 to vector<64x128xf32>
      %20 = arith.maximumf %18, %19 : vector<64x128xf32>
      %21 = arith.truncf %20 : vector<64x128xf32> to vector<64x128xbf16>
      %c0_17 = arith.constant 0 : index
      %c0_18 = arith.constant 0 : index
      %22 = vector.load %arg6[%c0_17, %c0_18] : memref<128x128xbf16, #tpu.memory_space<vmem>>, vector<128x128xbf16>
      %cst_19 = arith.constant dense<0.000000e+00> : vector<64x128xf32>
      %23 = tpu.matmul %21, %22, %cst_19 {dimension_numbers = #tpu.dot_dimension_numbers<[1], [0], [0], [1], [0, 0, 1, 1], [], []>} : vector<64x128xbf16>, vector<128x128xbf16>, vector<64x128xf32> -> vector<64x128xf32>
      %24 = arith.truncf %23 : vector<64x128xf32> to vector<64x128xbf16>
      %c0_20 = arith.constant 0 : index
      %c0_21 = arith.constant 0 : index
      %25 = vector.load %arg7[%c0_20, %c0_21] : memref<64x128xbf16, #tpu.memory_space<vmem>>, vector<64x128xbf16>
      tpu.vector_store %arg7[%c0_20, %c0_21], %24 {strides = array<i32>} : memref<64x128xbf16, #tpu.memory_space<vmem>>, vector<64x128xbf16>,
    } else {
    }
    return
  }
  func.func @transform_0(%arg0: i32, %arg1: i32) -> (i32, i32) {
    %c0_i32 = arith.constant 0 : i32
    return %arg0, %arg1 : i32, i32
  }
  func.func @transform_1(%arg0: i32, %arg1: i32) -> (i32, i32) {
    %c0_i32 = arith.constant 0 : i32
    %c0_i32_0 = arith.constant 0 : i32
    return %arg1, %c0_i32 : i32, i32
  }
  func.func @transform_2(%arg0: i32, %arg1: i32) -> (i32, i32) {
    %c0_i32 = arith.constant 0 : i32
    %c0_i32_0 = arith.constant 0 : i32
    %c0_i32_1 = arith.constant 0 : i32
    return %c0_i32, %c0_i32_0 : i32, i32
  }
  func.func @transform_3(%arg0: i32, %arg1: i32) -> (i32, i32) {
    %c0_i32 = arith.constant 0 : i32
    %c0_i32_0 = arith.constant 0 : i32
    %c0_i32_1 = arith.constant 0 : i32
    return %c0_i32, %c0_i32_0 : i32, i32
  }
  func.func @transform_4(%arg0: i32, %arg1: i32) -> (i32, i32) {
    %c0_i32 = arith.constant 0 : i32
    %c0_i32_0 = arith.constant 0 : i32
    %c0_i32_1 = arith.constant 0 : i32
    return %c0_i32, %c0_i32_0 : i32, i32
  }
  func.func @transform_5(%arg0: i32, %arg1: i32) -> (i32, i32) {
    %c0_i32 = arith.constant 0 : i32
    %c0_i32_0 = arith.constant 0 : i32
    return %arg0, %c0_i32 : i32, i32
  }
}

</mosaic_0001>

<llo_original>
// kernel: tpu_custom_call.1
$region0: #{tpu_custom_call.1}
  #allocation0 [shape = 'u32[]', space=smem, size = 0x4, offset = 0x4, fixed_abs, tag = 'smem constant byte address 0x4 - core index']
  #allocation1 [shape = 'u32[144,128]{1,0:T(1,128)}', space=vmem, size = 0x12000, scoped, tag = 'internal scratch']
  #allocation2 [shape = 'f32[64,128]{1,0:T(8,128)}', space=vmem, size = 0x8000, scoped, tag = 'scratch operand']
  %s0 = inlined_call_operand.hbm [shape: bf16[256,256], index: 0, kind: input, shape index: {}]
  %s1 = inlined_call_operand.hbm [shape: bf16[256,128], index: 1, kind: input, shape index: {}]
  %s2 = inlined_call_operand.hbm [shape: bf16[128,128], index: 2, kind: input, shape index: {}]
  %s3 = inlined_call_operand.vmem [shape: f32[1,128], index: 3, kind: input, shape index: {}]
  %s4 = inlined_call_operand.hbm [shape: bf16[128,128], index: 4, kind: input, shape index: {}]
  %s5 = inlined_call_operand.hbm [shape: bf16[256,128], index: 5, kind: output, shape index: {}]
  %s6 = sld [smem:[#allocation0]]
  $region77: #{tpu_custom_call.1} parent=0
    _
  %s8 = ssub.s32 1, %s6
  %s9 = scalar_select 0, %s8, %s6
  $region1: #{tpu_custom_call.1} parent=0
    #allocation3 [shape = 'u8[32768]{0}', space=vmem, size = 0x8000, scoped, tag = 'input window, operand 0']
    #allocation4 [shape = 's32[2]{0}', space=sflag, size = 0x8, scoped, tag = 'scoped memory for tpu_custom_call.1']
    #allocation5 [shape = 's32[2]{0}', space=sflag, size = 0x8, scoped, tag = 'scoped memory for tpu_custom_call.1']
    #allocation6 [shape = 'u8[65536]{0}', space=vmem, size = 0x10000, scoped, tag = 'input window, operand 1']
    #allocation7 [shape = 's32[2]{0}', space=sflag, size = 0x8, scoped, tag = 'scoped memory for tpu_custom_call.1']
    #allocation8 [shape = 'u8[32768]{0}', space=vmem, size = 0x8000, scoped, tag = 'input window, operand 2, single buffered']
    #allocation9 [shape = 'u8[32768]{0}', space=vmem, size = 0x8000, scoped, tag = 'input window, operand 4, single buffered']
    #allocation10 [shape = 's32[1]{0}', space=sflag, size = 0x4, scoped, tag = 'scoped memory for tpu_custom_call.1']
    #allocation11 [shape = 'u8[32768]{0}', space=vmem, size = 0x8000, scoped, tag = 'output window, operand 0']
    %10 = vsyncpa [#allocation4], 0
    %s11 = scalar_lea.sflag [#allocation4], 1
    %12 = vsyncpa %s11, 0
    %13 = vsyncpa [#allocation7], 0
    %s14 = scalar_lea.sflag [#allocation7], 1
    %15 = vsyncpa %s14, 0
    %16 = vsyncpa [#allocation10], 0
    %17 = vsyncpa [#allocation5], 0
    %s18 = scalar_lea.sflag [#allocation5], 1
    %19 = vsyncpa %s18, 0
    loop: start=0, step=1, limit=10
    $region2: #{tpu_custom_call.1} parent=1 // loop_pre_header
      _
    $region3: #{tpu_custom_call.1} parent=1 // loop_header
      %s21 = sphi 0, %s25
      %p22 = scmp.ge.s32.totalorder %s21, 10
      %s28 = sphi 0, %s40
      %s29 = sphi 0, %s36
      %s30 = sphi 0, %s28
      %s31 = sphi 0, %s29
      %s32 = sphi 0, %s30
      %s33 = sphi 0, %s31
      %s45 = sphi 0, %s47
      %s48 = sphi 0, %s45
      %s49 = sphi 0, %s48
      %s65 = sphi 0, %s49
      %s71 = sphi 0, %s73
      %s74 = sphi 0, %s71
      %s75 = sphi 0, %s74
      %s91 = sphi 0, %s75
      %s95 = sphi 0, %s95
      %s97 = sphi 0, %s95
      %s98 = sphi 0, %s97
      %s112 = sphi 0, %s98
      %s116 = sphi 0, %s116
      %s118 = sphi 0, %s116
      %s119 = sphi 0, %s118
      %s133 = sphi 0, %s119
      %s137 = sphi 0, %s137
      %s139 = sphi 0, %s137
      %s140 = sphi 0, %s139
      %s154 = sphi 0, %s140
      %s160 = sphi 0, %s162
      %s163 = sphi 0, %s160
      %s164 = sphi 0, %s163
      %s180 = sphi 0, %s164
    $region4: #{tpu_custom_call.1} parent=1 // loop_header_branch
      %24 = sbr.rel (%p22) target = $region8
    $region5: #{tpu_custom_call.1} parent=1 // loop_body
      %s26 = ssub.s32 %s21, 1
      %s27 = ssub.s32 %s21, 2
      %s34 = sadd.s32 1, %s29
      %p35 = scmp.ge.s32.totalorder %s34, 2
      %s36 = scalar_select %p35, 0, %s34
      %s37 = sadd.s32 1, %s28
      %s38 = scalar_select %p35, %s37, %s28
      %p39 = scmp.ge.s32.totalorder %s38, 4
      %s40 = scalar_select %p39, 0, %s38
      %s41 = ssub.s32 %s28, %s40
      %s42 = ssub.s32 %s29, %s36
      %s43 = sor.u32 %s41, %s42
      %p44 = scmp.eq.s32.totalorder %s43, 0
      %s46 = sadd.s32 %s45, 1
      %s47 = scalar_select %p44, %s45, %s46
      %p50 = pneg %p44
      %p51 = scmp.eq.s32.totalorder %s21, 7
      %p52 = por %p50, %p51
      %p53 = scmp.ne.s32.totalorder %s45, %s48
      %p54 = scmp.eq.s32.totalorder %s21, 0
      %p55 = por %p53, %p54
      %p56 = scmp.ne.s32.totalorder %s45, %s48
      %p57 = scmp.eq.s32.totalorder %s26, 7
      %p58 = por %p56, %p57
      %p59 = scmp.ne.s32.totalorder %s48, %s49
      %p60 = scmp.eq.s32.totalorder %s26, 0
      %p61 = por %p59, %p60
      %p62 = scmp.ne.s32.totalorder %s48, %s49
      %p63 = scmp.eq.s32.totalorder %s27, 7
      %p64 = por %p62, %p63
      %p66 = scmp.ne.s32.totalorder %s49, %s65
      %p67 = scmp.eq.s32.totalorder %s27, 0
      %p68 = por %p66, %p67
      %s69 = ssub.s32 %s29, %s36
      %p70 = scmp.eq.s32.totalorder %s69, 0
      %s72 = sadd.s32 %s71, 1
      %s73 = scalar_select %p70, %s71, %s72
      %p76 = pneg %p70
      %p77 = scmp.eq.s32.totalorder %s21, 7
      %p78 = por %p76, %p77
      %p79 = scmp.ne.s32.totalorder %s71, %s74
      %p80 = scmp.eq.s32.totalorder %s21, 0
      %p81 = por %p79, %p80
      %p82 = scmp.ne.s32.totalorder %s71, %s74
      %p83 = scmp.eq.s32.totalorder %s26, 7
      %p84 = por %p82, %p83
      %p85 = scmp.ne.s32.totalorder %s74, %s75
      %p86 = scmp.eq.s32.totalorder %s26, 0
      %p87 = por %p85, %p86
      %p88 = scmp.ne.s32.totalorder %s74, %s75
      %p89 = scmp.eq.s32.totalorder %s27, 7
      %p90 = por %p88, %p89
      %p92 = scmp.ne.s32.totalorder %s75, %s91
      %p93 = scmp.eq.s32.totalorder %s27, 0
      %p94 = por %p92, %p93
      %s96 = sadd.s32 %s95, 1
      %p99 = scmp.eq.s32.totalorder %s21, 7
      %p100 = scmp.ne.s32.totalorder %s95, %s97
      %p101 = scmp.eq.s32.totalorder %s21, 0
      %p102 = por %p100, %p101
      %p103 = scmp.ne.s32.totalorder %s95, %s97
      %p104 = scmp.eq.s32.totalorder %s26, 7
      %p105 = por %p103, %p104
      %p106 = scmp.ne.s32.totalorder %s97, %s98
      %p107 = scmp.eq.s32.totalorder %s26, 0
      %p108 = por %p106, %p107
      %p109 = scmp.ne.s32.totalorder %s97, %s98
      %p110 = scmp.eq.s32.totalorder %s27, 7
      %p111 = por %p109, %p110
      %p113 = scmp.ne.s32.totalorder %s98, %s112
      %p114 = scmp.eq.s32.totalorder %s27, 0
      %p115 = por %p113, %p114
      %s117 = sadd.s32 %s116, 1
      %p120 = scmp.eq.s32.totalorder %s21, 7
      %p121 = scmp.ne.s32.totalorder %s116, %s118
      %p122 = scmp.eq.s32.totalorder %s21, 0
      %p123 = por %p121, %p122
      %p124 = scmp.ne.s32.totalorder %s116, %s118
      %p125 = scmp.eq.s32.totalorder %s26, 7
      %p126 = por %p124, %p125
      %p127 = scmp.ne.s32.totalorder %s118, %s119
      %p128 = scmp.eq.s32.totalorder %s26, 0
      %p129 = por %p127, %p128
      %p130 = scmp.ne.s32.totalorder %s118, %s119
      %p131 = scmp.eq.s32.totalorder %s27, 7
      %p132 = por %p130, %p131
      %p134 = scmp.ne.s32.totalorder %s119, %s133
      %p135 = scmp.eq.s32.totalorder %s27, 0
      %p136 = por %p134, %p135
      %s138 = sadd.s32 %s137, 1
      %p141 = scmp.eq.s32.totalorder %s21, 7
      %p142 = scmp.ne.s32.totalorder %s137, %s139
      %p143 = scmp.eq.s32.totalorder %s21, 0
      %p144 = por %p142, %p143
      %p145 = scmp.ne.s32.totalorder %s137, %s139
      %p146 = scmp.eq.s32.totalorder %s26, 7
      %p147 = por %p145, %p146
      %p148 = scmp.ne.s32.totalorder %s139, %s140
      %p149 = scmp.eq.s32.totalorder %s26, 0
      %p150 = por %p148, %p149
      %p151 = scmp.ne.s32.totalorder %s139, %s140
      %p152 = scmp.eq.s32.totalorder %s27, 7
      %p153 = por %p151, %p152
      %p155 = scmp.ne.s32.totalorder %s140, %s154
      %p156 = scmp.eq.s32.totalorder %s27, 0
      %p157 = por %p155, %p156
      %s158 = ssub.s32 %s28, %s40
      %p159 = scmp.eq.s32.totalorder %s158, 0
      %s161 = sadd.s32 %s160, 1
      %s162 = scalar_select %p159, %s160, %s161
      %p165 = pneg %p159
      %p166 = scmp.eq.s32.totalorder %s21, 7
      %p167 = por %p165, %p166
      %p168 = scmp.ne.s32.totalorder %s160, %s163
      %p169 = scmp.eq.s32.totalorder %s21, 0
      %p170 = por %p168, %p169
      %p171 = scmp.ne.s32.totalorder %s160, %s163
      %p172 = scmp.eq.s32.totalorder %s26, 7
      %p173 = por %p171, %p172
      %p174 = scmp.ne.s32.totalorder %s163, %s164
      %p175 = scmp.eq.s32.totalorder %s26, 0
      %p176 = por %p174, %p175
      %p177 = scmp.ne.s32.totalorder %s163, %s164
      %p178 = scmp.eq.s32.totalorder %s27, 7
      %p179 = por %p177, %p178
      %p181 = scmp.ne.s32.totalorder %s164, %s180
      %p182 = scmp.eq.s32.totalorder %s27, 0
      %p183 = por %p181, %p182
      %p184 = scmp.le.s32.totalorder 1, %s21
      %p185 = scmp.lt.s32.totalorder %s21, 9
      %p186 = pnand %p184, %p185
      %p187 = pneg %p186
      // Predicated region
      $region9: #{tpu_custom_call.1} parent=5 // pred_check
        _
      $region10: #{tpu_custom_call.1} parent=5 // pred_check_branch
        %189 = sbr.rel (%p186) target = $region12
      $region11: #{tpu_custom_call.1} parent=5 // pred_region
        %s190 = ssub.s32 %s21, 1
        // Predicated region
        $region13: #{tpu_custom_call.1} parent=11 // pred_check
          %p191 = pneg %p108
        $region14: #{tpu_custom_call.1} parent=11 // pred_check_branch
          %193 = sbr.rel (%p191) target = $region16
        $region15: #{tpu_custom_call.1} parent=11 // pred_region
          %s195 = ssub.s32 1024, 1024
          %196 = vsyncadd [#allocation7], %s195
          %s197 = sshll.u32 [#allocation8], 4
          %s198 = int_to_ptr.vmem [resolvable:$true] %s197
          %203 = dma.hbm_to_vmem [thread:$0]  %s2, 1024, %s198, [#allocation7], 64, 64, 4
        $region16: #{tpu_custom_call.1} parent=11 // pred_fallthru
          _
        // Predicated region
        $region17: #{tpu_custom_call.1} parent=11 // pred_check
          %p204 = pneg %p129
        $region18: #{tpu_custom_call.1} parent=11 // pred_check_branch
          %206 = sbr.rel (%p204) target = $region20
        $region19: #{tpu_custom_call.1} parent=11 // pred_region
          _
        $region20: #{tpu_custom_call.1} parent=11 // pred_fallthru
          _
        // Predicated region
        $region21: #{tpu_custom_call.1} parent=11 // pred_check
          %p207 = pneg %p150
        $region22: #{tpu_custom_call.1} parent=11 // pred_check_branch
          %209 = sbr.rel (%p207) target = $region24
        $region23: #{tpu_custom_call.1} parent=11 // pred_region
          %s211 = ssub.s32 1024, 1024
          %212 = vsyncadd [#allocation10], %s211
          %s213 = sshll.u32 [#allocation9], 4
          %s214 = int_to_ptr.vmem [resolvable:$true] %s213
          %219 = dma.hbm_to_vmem [thread:$0]  %s4, 1024, %s214, [#allocation10], 64, 64, 4
        $region24: #{tpu_custom_call.1} parent=11 // pred_fallthru
          _
      $region12: #{tpu_custom_call.1} parent=5 // pred_fallthru
        _
      %p220 = scmp.lt.s32.totalorder %s21, 8
      // Predicated region
      $region25: #{tpu_custom_call.1} parent=5 // pred_check
        %p221 = pneg %p220
      $region26: #{tpu_custom_call.1} parent=5 // pred_check_branch
        %223 = sbr.rel (%p221) target = $region28
      $region27: #{tpu_custom_call.1} parent=5 // pred_region
        // Predicated region
        $region29: #{tpu_custom_call.1} parent=27 // pred_check
          %p224 = pneg %p55
        $region30: #{tpu_custom_call.1} parent=27 // pred_check_branch
          %226 = sbr.rel (%p224) target = $region32
        $region31: #{tpu_custom_call.1} parent=27 // pred_region
          %s227 = sand.u32 %s45, 1
          %s228 = scalar_lea.sflag [#allocation4], %s227
          %s229 = sand.u32 %s45, 1
          %s230 = smul.addr %s229, 32
          %s231 = scalar_lea.vmem [#allocation3], %s230
          %s232 = smul.u32 8, %s28
          %s234 = ssub.s32 512, 512
          %235 = vsyncadd %s228, %s234
          %s236 = smul.addr %s232, 2
          %s237 = sadd.s32 %s29, %s236
          %s238 = smul.addr %s237, 64
          %s239 = scalar_lea.hbm %s0, %s238
          %s240 = sshll.u32 %s231, 4
          %s241 = int_to_ptr.vmem [resolvable:$true] %s240
          %246 = dma.hbm_to_vmem [thread:$0]  %s239, 512, %s241, %s228, 128, 64, 4
        $region32: #{tpu_custom_call.1} parent=27 // pred_fallthru
          _
        // Predicated region
        $region33: #{tpu_custom_call.1} parent=27 // pred_check
          %p247 = pneg %p81
        $region34: #{tpu_custom_call.1} parent=27 // pred_check_branch
          %249 = sbr.rel (%p247) target = $region36
        $region35: #{tpu_custom_call.1} parent=27 // pred_region
          %s250 = sand.u32 %s21, 1
          %s251 = scalar_lea.sflag [#allocation7], %s250
          %s252 = sand.u32 %s71, 1
          %s253 = smul.addr %s252, 64
          %s254 = scalar_lea.vmem [#allocation6], %s253
          %s255 = smul.u32 16, %s29
          %s257 = ssub.s32 1024, 1024
          %258 = vsyncadd %s251, %s257
          %s259 = smul.addr %s255, 64
          %s260 = scalar_lea.hbm %s1, %s259
          %s261 = sshll.u32 %s254, 4
          %s262 = int_to_ptr.vmem [resolvable:$true] %s261
          %267 = dma.hbm_to_vmem [thread:$0]  %s260, 1024, %s262, %s251, 64, 64, 4
        $region36: #{tpu_custom_call.1} parent=27 // pred_fallthru
          _
      $region28: #{tpu_custom_call.1} parent=5 // pred_fallthru
        _
      %p268 = scmp.le.s32.totalorder 1, %s21
      %p269 = scmp.lt.s32.totalorder %s21, 9
      %p270 = pnand %p268, %p269
      %p271 = pneg %p270
      // Predicated region
      $region37: #{tpu_custom_call.1} parent=5 // pred_check
        _
      $region38: #{tpu_custom_call.1} parent=5 // pred_check_branch
        %273 = sbr.rel (%p270) target = $region40
      $region39: #{tpu_custom_call.1} parent=5 // pred_region
        %s274 = ssub.s32 %s21, 1
        %s275 = sand.u32 %s48, 1
        %s276 = scalar_lea.sflag [#allocation4], %s275
        %s277 = sand.u32 %s48, 1
        %s278 = smul.addr %s277, 32
        %s279 = scalar_lea.vmem [#allocation3], %s278
        // Predicated region
        $region41: #{tpu_custom_call.1} parent=39 // pred_check
          %p280 = pneg %p61
        $region42: #{tpu_custom_call.1} parent=39 // pred_check_branch
          %282 = sbr.rel (%p280) target = $region44
        $region43: #{tpu_custom_call.1} parent=39 // pred_region
          %283 = dma.done %s276, 512
        $region44: #{tpu_custom_call.1} parent=39 // pred_fallthru
          _
        %s284 = sand.u32 %s26, 1
        %s285 = scalar_lea.sflag [#allocation7], %s284
        %s286 = sand.u32 %s74, 1
        %s287 = smul.addr %s286, 64
        %s288 = scalar_lea.vmem [#allocation6], %s287
        // Predicated region
        $region45: #{tpu_custom_call.1} parent=39 // pred_check
          %p289 = pneg %p87
        $region46: #{tpu_custom_call.1} parent=39 // pred_check_branch
          %291 = sbr.rel (%p289) target = $region48
        $region47: #{tpu_custom_call.1} parent=39 // pred_region
          %292 = dma.done %s285, 1024
        $region48: #{tpu_custom_call.1} parent=39 // pred_fallthru
          _
        // Predicated region
        $region49: #{tpu_custom_call.1} parent=39 // pred_check
          %p293 = pneg %p108
        $region50: #{tpu_custom_call.1} parent=39 // pred_check_branch
          %295 = sbr.rel (%p293) target = $region52
        $region51: #{tpu_custom_call.1} parent=39 // pred_region
          %296 = dma.done [#allocation7], 1024
        $region52: #{tpu_custom_call.1} parent=39 // pred_fallthru
          _
        // Predicated region
        $region53: #{tpu_custom_call.1} parent=39 // pred_check
          %p297 = pneg %p150
        $region54: #{tpu_custom_call.1} parent=39 // pred_check_branch
          %299 = sbr.rel (%p297) target = $region56
        $region55: #{tpu_custom_call.1} parent=39 // pred_region
          %300 = dma.done [#allocation10], 1024
        $region56: #{tpu_custom_call.1} parent=39 // pred_fallthru
          _
        %s301 = sand.u32 %s48, 1
        %s302 = scalar_lea.sflag [#allocation4], %s301
        %s303 = sand.u32 %s48, 1
        %s304 = smul.addr %s303, 32
        %s305 = scalar_lea.vmem [#allocation3], %s304
        %p306 = pneg %p61
        %p307 = pneg %p58
        %s308 = sand.u32 %s26, 1
        %s309 = scalar_lea.sflag [#allocation7], %s308
        %s310 = sand.u32 %s74, 1
        %s311 = smul.addr %s310, 64
        %s312 = scalar_lea.vmem [#allocation6], %s311
        %p313 = pneg %p87
        %p314 = pneg %p84
        %p315 = pneg %p108
        %p316 = pneg %p105
        %p317 = pneg %p129
        %p318 = pneg %p126
        %p319 = pneg %p150
        %p320 = pneg %p147
        %p321 = pneg %p176
        %p322 = pneg %p173
        %s323 = sand.u32 %s163, 1
        %s324 = scalar_lea.sflag [#allocation5], %s323
        %s325 = sand.u32 %s163, 1
        %s326 = smul.addr %s325, 32
        %s327 = scalar_lea.vmem [#allocation11], %s326
        %s328 = smul.u32 8, %s30
        %s329 = smul.u32 16, %s31
        %s330 = smul.u32 8, %s30
        %p332 = scmp.eq.s32.totalorder %s31, 0
        // Predicated region
        $region57: #{tpu_custom_call.1} parent=39 // pred_check
          %p333 = pneg %p332
        $region58: #{tpu_custom_call.1} parent=39 // pred_check_branch
          %335 = sbr.rel (%p333) target = $region60
        $region59: #{tpu_custom_call.1} parent=39 // pred_region
          %336 = vst [vmem:[#allocation2] sm:$0xff] 0.0
          %337 = vst [vmem:[#allocation2 + $0x8] sm:$0xff] 0.0
          %338 = vst [vmem:[#allocation2 + $0x10] sm:$0xff] 0.0
          %339 = vst [vmem:[#allocation2 + $0x18] sm:$0xff] 0.0
          %340 = vst [vmem:[#allocation2 + $0x20] sm:$0xff] 0.0
          %341 = vst [vmem:[#allocation2 + $0x28] sm:$0xff] 0.0
          %342 = vst [vmem:[#allocation2 + $0x30] sm:$0xff] 0.0
          %343 = vst [vmem:[#allocation2 + $0x38] sm:$0xff] 0.0
        $region60: #{tpu_custom_call.1} parent=39 // pred_fallthru
          _
        %v344 = vld [vmem:[#allocation2] sm:$0xff]
        %v345 = vld [vmem:[#allocation2 + $0x8] sm:$0xff]
        %v346 = vld [vmem:[#allocation2 + $0x10] sm:$0xff]
        %v347 = vld [vmem:[#allocation2 + $0x18] sm:$0xff]
        %v348 = vld [vmem:[#allocation2 + $0x20] sm:$0xff]
        %v349 = vld [vmem:[#allocation2 + $0x28] sm:$0xff]
        %v350 = vld [vmem:[#allocation2 + $0x30] sm:$0xff]
        %v351 = vld [vmem:[#allocation2 + $0x38] sm:$0xff]
        %v352 = vld [vmem:[%s279] sm:$0xf]
        %v353 = vld [vmem:[%s279 + $0x4] sm:$0xf]
        %v354 = vld [vmem:[%s279 + $0x8] sm:$0xf]
        %v355 = vld [vmem:[%s279 + $0xc] sm:$0xf]
        %v356 = vld [vmem:[%s279 + $0x10] sm:$0xf]
        %v357 = vld [vmem:[%s279 + $0x14] sm:$0xf]
        %v358 = vld [vmem:[%s279 + $0x18] sm:$0xf]
        %v359 = vld [vmem:[%s279 + $0x1c] sm:$0xf]
        %v360 = vld [vmem:[%s288] sm:$0xf]
        %v361 = vld [vmem:[%s288 + $0x4] sm:$0xf]
        %v362 = vld [vmem:[%s288 + $0x8] sm:$0xf]
        %v363 = vld [vmem:[%s288 + $0xc] sm:$0xf]
        %v364 = vld [vmem:[%s288 + $0x10] sm:$0xf]
        %v365 = vld [vmem:[%s288 + $0x14] sm:$0xf]
        %v366 = vld [vmem:[%s288 + $0x18] sm:$0xf]
        %v367 = vld [vmem:[%s288 + $0x1c] sm:$0xf]
        %v368 = vld [vmem:[%s288 + $0x20] sm:$0xf]
        %v369 = vld [vmem:[%s288 + $0x24] sm:$0xf]
        %v370 = vld [vmem:[%s288 + $0x28] sm:$0xf]
        %v371 = vld [vmem:[%s288 + $0x2c] sm:$0xf]
        %v372 = vld [vmem:[%s288 + $0x30] sm:$0xf]
        %v373 = vld [vmem:[%s288 + $0x34] sm:$0xf]
        %v374 = vld [vmem:[%s288 + $0x38] sm:$0xf]
        %v375 = vld [vmem:[%s288 + $0x3c] sm:$0xf]
        %v384 = vunpack.c.l.b16 %v352
        %v385 = vunpack.c.l.b16 %v353
        %v386 = vunpack.c.l.b16 %v354
        %v387 = vunpack.c.l.b16 %v355
        %v388 = vunpack.c.l.b16 %v356
        %v389 = vunpack.c.l.b16 %v357
        %v390 = vunpack.c.l.b16 %v358
        %v391 = vunpack.c.l.b16 %v359
        %v392 = vpack.c.b16 %v385, %v384
        %v393 = vpack.c.b16 %v387, %v386
        %v394 = vpack.c.b16 %v389, %v388
        %v395 = vpack.c.b16 %v391, %v390
        %v416 = vunpack.c.l.b16 %v360
        %v417 = vunpack.c.l.b16 %v361
        %v418 = vunpack.c.l.b16 %v362
        %v419 = vunpack.c.l.b16 %v363
        %v420 = vunpack.c.l.b16 %v364
        %v421 = vunpack.c.l.b16 %v365
        %v422 = vunpack.c.l.b16 %v366
        %v423 = vunpack.c.l.b16 %v367
        %v424 = vunpack.c.l.b16 %v368
        %v425 = vunpack.c.l.b16 %v369
        %v426 = vunpack.c.l.b16 %v370
        %v427 = vunpack.c.l.b16 %v371
        %v428 = vunpack.c.l.b16 %v372
        %v429 = vunpack.c.l.b16 %v373
        %v430 = vunpack.c.l.b16 %v374
        %v431 = vunpack.c.l.b16 %v375
        %v432 = vpack.c.b16 %v417, %v416
        %v433 = vpack.c.b16 %v419, %v418
        %v434 = vpack.c.b16 %v421, %v420
        %v435 = vpack.c.b16 %v423, %v422
        %v436 = vpack.c.b16 %v425, %v424
        %v437 = vpack.c.b16 %v427, %v426
        %v438 = vpack.c.b16 %v429, %v428
        %v439 = vpack.c.b16 %v431, %v430
        %448 = vmatprep.subr.bf16.mxu0 0
        %449 = vmatpush1.bf16.msra.mxu0 %v439
        %450 = vmatprep.subr.bf16.mxu0 0
        %451 = vmatpush1.bf16.msra.mxu0 %v438
        %452 = vmatprep.subr.bf16.mxu0 0
        %453 = vmatpush1.bf16.msra.mxu0 %v437
        %454 = vmatprep.subr.bf16.mxu0 0
        %455 = vmatpush1.bf16.msra.mxu0 %v436
        %456 = vmatprep.subr.bf16.mxu0 0
        %457 = vmatpush1.bf16.msra.mxu0 %v435
        %458 = vmatprep.subr.bf16.mxu0 0
        %459 = vmatpush1.bf16.msra.mxu0 %v434
        %460 = vmatprep.subr.bf16.mxu0 0
        %461 = vmatpush1.bf16.msra.mxu0 %v433
        %462 = vmatprep.subr.bf16.mxu0 0
        %463 = vmatpush1.bf16.msra.mxu0 %v432
        %464 = vmatprep.subr.bf16.mxu0 0
        %465 = vmatpush2.bf16.msra.mxu0 0
        %466 = vmatprep.subr.bf16.mxu0 0
        %467 = vmatpush2.bf16.msra.mxu0 0
        %468 = vmatprep.subr.bf16.mxu0 0
        %469 = vmatpush2.bf16.msra.mxu0 0
        %470 = vmatprep.subr.bf16.mxu0 0
        %471 = vmatpush2.bf16.msra.mxu0 0
        %472 = vmatprep.subr.bf16.mxu0 0
        %473 = vmatpush2.bf16.msra.mxu0 0
        %474 = vmatprep.subr.bf16.mxu0 0
        %475 = vmatpush2.bf16.msra.mxu0 0
        %476 = vmatprep.subr.bf16.mxu0 0
        %477 = vmatpush2.bf16.msra.mxu0 0
        %478 = vmatprep.subr.bf16.mxu0 0
        %479 = vmatpush2.bf16.msra.mxu0 0
        %480 = vmatprep.mubr.bf16.mxu0 0
        %481 = vmatmul.mubr.bf16.gmra.mxu0 %v392
        %v482 = vpop.f32.mrf.mxu0
        %v483 = vadd.f32 0.0, %v482
        %v484 = vpop.f32.mrf.mxu0
        %v485 = vpop.f32.mrf.mxu0
        %v486 = vadd.f32 0.0, %v485
        %v487 = vpop.f32.mrf.mxu0
        %488 = vmatprep.mubr.bf16.mxu0 0
        %489 = vmatmul.mubr.bf16.gmra.mxu0 %v393
        %v490 = vpop.f32.mrf.mxu0
        %v491 = vadd.f32 0.0, %v490
        %v492 = vpop.f32.mrf.mxu0
        %v493 = vpop.f32.mrf.mxu0
        %v494 = vadd.f32 0.0, %v493
        %v495 = vpop.f32.mrf.mxu0
        %496 = vmatprep.mubr.bf16.mxu0 0
        %497 = vmatmul.mubr.bf16.gmra.mxu0 %v394
        %v498 = vpop.f32.mrf.mxu0
        %v499 = vadd.f32 0.0, %v498
        %v500 = vpop.f32.mrf.mxu0
        %v501 = vpop.f32.mrf.mxu0
        %v502 = vadd.f32 0.0, %v501
        %v503 = vpop.f32.mrf.mxu0
        %504 = vmatprep.mubr.bf16.mxu0 0
        %505 = vmatmul.mubr.bf16.gmra.mxu0 %v395
        %v506 = vpop.f32.mrf.mxu0
        %v507 = vadd.f32 0.0, %v506
        %v508 = vpop.f32.mrf.mxu0
        %v509 = vpop.f32.mrf.mxu0
        %v510 = vadd.f32 0.0, %v509
        %v511 = vpop.f32.mrf.mxu0
        %512 = vdwg.mxu0
        %v513 = vadd.f32 %v344, %v483
        %v514 = vadd.f32 %v345, %v486
        %v515 = vadd.f32 %v346, %v491
        %v516 = vadd.f32 %v347, %v494
        %v517 = vadd.f32 %v348, %v499
        %v518 = vadd.f32 %v349, %v502
        %v519 = vadd.f32 %v350, %v507
        %v520 = vadd.f32 %v351, %v510
        %521 = vst [vmem:[#allocation2] sm:$0xff] %v513
        %522 = vst [vmem:[#allocation2 + $0x8] sm:$0xff] %v514
        %523 = vst [vmem:[#allocation2 + $0x10] sm:$0xff] %v515
        %524 = vst [vmem:[#allocation2 + $0x18] sm:$0xff] %v516
        %525 = vst [vmem:[#allocation2 + $0x20] sm:$0xff] %v517
        %526 = vst [vmem:[#allocation2 + $0x28] sm:$0xff] %v518
        %527 = vst [vmem:[#allocation2 + $0x30] sm:$0xff] %v519
        %528 = vst [vmem:[#allocation2 + $0x38] sm:$0xff] %v520
        %p529 = scmp.eq.s32.totalorder %s31, 1
        // Predicated region
        $region61: #{tpu_custom_call.1} parent=39 // pred_check
          %p530 = pneg %p529
        $region62: #{tpu_custom_call.1} parent=39 // pred_check_branch
          %532 = sbr.rel (%p530) target = $region64
        $region63: #{tpu_custom_call.1} parent=39 // pred_region
          %v533 = vld [vmem:[#allocation2] sm:$0xff]
          %v534 = vld [vmem:[#allocation2 + $0x8] sm:$0xff]
          %v535 = vld [vmem:[#allocation2 + $0x10] sm:$0xff]
          %v536 = vld [vmem:[#allocation2 + $0x18] sm:$0xff]
          %v537 = vld [vmem:[#allocation2 + $0x20] sm:$0xff]
          %v538 = vld [vmem:[#allocation2 + $0x28] sm:$0xff]
          %v539 = vld [vmem:[#allocation2 + $0x30] sm:$0xff]
          %v540 = vld [vmem:[#allocation2 + $0x38] sm:$0xff]
          %v541 = vpack.c.bf16 %v534, %v533
          %v542 = vpack.c.bf16 %v536, %v535
          %v543 = vpack.c.bf16 %v538, %v537
          %v544 = vpack.c.bf16 %v540, %v539
          %v545 = vld [vmem:[#allocation8] sm:$0xf]
          %v546 = vld [vmem:[#allocation8 + $0x4] sm:$0xf]
          %v547 = vld [vmem:[#allocation8 + $0x8] sm:$0xf]
          %v548 = vld [vmem:[#allocation8 + $0xc] sm:$0xf]
          %v549 = vld [vmem:[#allocation8 + $0x10] sm:$0xf]
          %v550 = vld [vmem:[#allocation8 + $0x14] sm:$0xf]
          %v551 = vld [vmem:[#allocation8 + $0x18] sm:$0xf]
          %v552 = vld [vmem:[#allocation8 + $0x1c] sm:$0xf]
          %v553 = vld [vmem:[#allocation8 + $0x20] sm:$0xf]
          %v554 = vld [vmem:[#allocation8 + $0x24] sm:$0xf]
          %v555 = vld [vmem:[#allocation8 + $0x28] sm:$0xf]
          %v556 = vld [vmem:[#allocation8 + $0x2c] sm:$0xf]
          %v557 = vld [vmem:[#allocation8 + $0x30] sm:$0xf]
          %v558 = vld [vmem:[#allocation8 + $0x34] sm:$0xf]
          %v559 = vld [vmem:[#allocation8 + $0x38] sm:$0xf]
          %v560 = vld [vmem:[#allocation8 + $0x3c] sm:$0xf]
          %v561 = vld [vmem:[%s3] sm:$0x1]
          %v563 = vlaneseq
          %v564 = vshrl.u32 %v563, 7
          %v565 = vsub.s32 0, %v564
          %v566 = vrot.slane %v561, %v565
          %v584 = vunpack.c.l.b16 %v545
          %v585 = vunpack.c.l.b16 %v546
          %v586 = vunpack.c.l.b16 %v547
          %v587 = vunpack.c.l.b16 %v548
          %v588 = vunpack.c.l.b16 %v549
          %v589 = vunpack.c.l.b16 %v550
          %v590 = vunpack.c.l.b16 %v551
          %v591 = vunpack.c.l.b16 %v552
          %v592 = vunpack.c.l.b16 %v553
          %v593 = vunpack.c.l.b16 %v554
          %v594 = vunpack.c.l.b16 %v555
          %v595 = vunpack.c.l.b16 %v556
          %v596 = vunpack.c.l.b16 %v557
          %v597 = vunpack.c.l.b16 %v558
          %v598 = vunpack.c.l.b16 %v559
          %v599 = vunpack.c.l.b16 %v560
          %v600 = vpack.c.b16 %v585, %v584
          %v601 = vpack.c.b16 %v587, %v586
          %v602 = vpack.c.b16 %v589, %v588
          %v603 = vpack.c.b16 %v591, %v590
          %v604 = vpack.c.b16 %v593, %v592
          %v605 = vpack.c.b16 %v595, %v594
          %v606 = vpack.c.b16 %v597, %v596
          %v607 = vpack.c.b16 %v599, %v598
          %616 = vmatprep.subr.bf16.mxu0 0
          %617 = vmatpush1.bf16.msra.mxu0 %v607
          %618 = vmatprep.subr.bf16.mxu0 0
          %619 = vmatpush1.bf16.msra.mxu0 %v606
          %620 = vmatprep.subr.bf16.mxu0 0
          %621 = vmatpush1.bf16.msra.mxu0 %v605
          %622 = vmatprep.subr.bf16.mxu0 0
          %623 = vmatpush1.bf16.msra.mxu0 %v604
          %624 = vmatprep.subr.bf16.mxu0 0
          %625 = vmatpush1.bf16.msra.mxu0 %v603
          %626 = vmatprep.subr.bf16.mxu0 0
          %627 = vmatpush1.bf16.msra.mxu0 %v602
          %628 = vmatprep.subr.bf16.mxu0 0
          %629 = vmatpush1.bf16.msra.mxu0 %v601
          %630 = vmatprep.subr.bf16.mxu0 0
          %631 = vmatpush1.bf16.msra.mxu0 %v600
          %632 = vmatprep.subr.bf16.mxu0 0
          %633 = vmatpush2.bf16.msra.mxu0 0
          %634 = vmatprep.subr.bf16.mxu0 0
          %635 = vmatpush2.bf16.msra.mxu0 0
          %636 = vmatprep.subr.bf16.mxu0 0
          %637 = vmatpush2.bf16.msra.mxu0 0
          %638 = vmatprep.subr.bf16.mxu0 0
          %639 = vmatpush2.bf16.msra.mxu0 0
          %640 = vmatprep.subr.bf16.mxu0 0
          %641 = vmatpush2.bf16.msra.mxu0 0
          %642 = vmatprep.subr.bf16.mxu0 0
          %643 = vmatpush2.bf16.msra.mxu0 0
          %644 = vmatprep.subr.bf16.mxu0 0
          %645 = vmatpush2.bf16.msra.mxu0 0
          %646 = vmatprep.subr.bf16.mxu0 0
          %647 = vmatpush2.bf16.msra.mxu0 0
          %648 = vmatprep.mubr.bf16.mxu0 0
          %649 = vmatmul.mubr.bf16.gmra.mxu0 %v541
          %v650 = vpop.f32.mrf.mxu0
          %v651 = vadd.f32 %v566, %v650
          %v652 = vpop.f32.mrf.mxu0
          %v653 = vpop.f32.mrf.mxu0
          %v654 = vadd.f32 %v566, %v653
          %v655 = vpop.f32.mrf.mxu0
          %656 = vmatprep.mubr.bf16.mxu0 0
          %657 = vmatmul.mubr.bf16.gmra.mxu0 %v542
          %v658 = vpop.f32.mrf.mxu0
          %v659 = vadd.f32 %v566, %v658
          %v660 = vpop.f32.mrf.mxu0
          %v661 = vpop.f32.mrf.mxu0
          %v662 = vadd.f32 %v566, %v661
          %v663 = vpop.f32.mrf.mxu0
          %664 = vmatprep.mubr.bf16.mxu0 0
          %665 = vmatmul.mubr.bf16.gmra.mxu0 %v543
          %v666 = vpop.f32.mrf.mxu0
          %v667 = vadd.f32 %v566, %v666
          %v668 = vpop.f32.mrf.mxu0
          %v669 = vpop.f32.mrf.mxu0
          %v670 = vadd.f32 %v566, %v669
          %v671 = vpop.f32.mrf.mxu0
          %672 = vmatprep.mubr.bf16.mxu0 0
          %673 = vmatmul.mubr.bf16.gmra.mxu0 %v544
          %v674 = vpop.f32.mrf.mxu0
          %v675 = vadd.f32 %v566, %v674
          %v676 = vpop.f32.mrf.mxu0
          %v677 = vpop.f32.mrf.mxu0
          %v678 = vadd.f32 %v566, %v677
          %v679 = vpop.f32.mrf.mxu0
          %680 = vdwg.mxu0
          %v681 = vmax.f32 %v651, 0.0
          %v682 = vmax.f32 %v654, 0.0
          %v683 = vmax.f32 %v659, 0.0
          %v684 = vmax.f32 %v662, 0.0
          %v685 = vmax.f32 %v667, 0.0
          %v686 = vmax.f32 %v670, 0.0
          %v687 = vmax.f32 %v675, 0.0
          %v688 = vmax.f32 %v678, 0.0
          %v689 = vpack.c.bf16 %v682, %v681
          %v690 = vpack.c.bf16 %v684, %v683
          %v691 = vpack.c.bf16 %v686, %v685
          %v692 = vpack.c.bf16 %v688, %v687
          %v693 = vld [vmem:[#allocation9] sm:$0xf]
          %v694 = vld [vmem:[#allocation9 + $0x4] sm:$0xf]
          %v695 = vld [vmem:[#allocation9 + $0x8] sm:$0xf]
          %v696 = vld [vmem:[#allocation9 + $0xc] sm:$0xf]
          %v697 = vld [vmem:[#allocation9 + $0x10] sm:$0xf]
          %v698 = vld [vmem:[#allocation9 + $0x14] sm:$0xf]
          %v699 = vld [vmem:[#allocation9 + $0x18] sm:$0xf]
          %v700 = vld [vmem:[#allocation9 + $0x1c] sm:$0xf]
          %v701 = vld [vmem:[#allocation9 + $0x20] sm:$0xf]
          %v702 = vld [vmem:[#allocation9 + $0x24] sm:$0xf]
          %v703 = vld [vmem:[#allocation9 + $0x28] sm:$0xf]
          %v704 = vld [vmem:[#allocation9 + $0x2c] sm:$0xf]
          %v705 = vld [vmem:[#allocation9 + $0x30] sm:$0xf]
          %v706 = vld [vmem:[#allocation9 + $0x34] sm:$0xf]
          %v707 = vld [vmem:[#allocation9 + $0x38] sm:$0xf]
          %v708 = vld [vmem:[#allocation9 + $0x3c] sm:$0xf]
          %v725 = vunpack.c.l.b16 %v693
          %v726 = vunpack.c.l.b16 %v694
          %v727 = vunpack.c.l.b16 %v695
          %v728 = vunpack.c.l.b16 %v696
          %v729 = vunpack.c.l.b16 %v697
          %v730 = vunpack.c.l.b16 %v698
          %v731 = vunpack.c.l.b16 %v699
          %v732 = vunpack.c.l.b16 %v700
          %v733 = vunpack.c.l.b16 %v701
          %v734 = vunpack.c.l.b16 %v702
          %v735 = vunpack.c.l.b16 %v703
          %v736 = vunpack.c.l.b16 %v704
          %v737 = vunpack.c.l.b16 %v705
          %v738 = vunpack.c.l.b16 %v706
          %v739 = vunpack.c.l.b16 %v707
          %v740 = vunpack.c.l.b16 %v708
          %v741 = vpack.c.b16 %v726, %v725
          %v742 = vpack.c.b16 %v728, %v727
          %v743 = vpack.c.b16 %v730, %v729
          %v744 = vpack.c.b16 %v732, %v731
          %v745 = vpack.c.b16 %v734, %v733
          %v746 = vpack.c.b16 %v736, %v735
          %v747 = vpack.c.b16 %v738, %v737
          %v748 = vpack.c.b16 %v740, %v739
          %757 = vmatprep.subr.bf16.mxu0 0
          %758 = vmatpush1.bf16.msra.mxu0 %v748
          %759 = vmatprep.subr.bf16.mxu0 0
          %760 = vmatpush1.bf16.msra.mxu0 %v747
          %761 = vmatprep.subr.bf16.mxu0 0
          %762 = vmatpush1.bf16.msra.mxu0 %v746
          %763 = vmatprep.subr.bf16.mxu0 0
          %764 = vmatpush1.bf16.msra.mxu0 %v745
          %765 = vmatprep.subr.bf16.mxu0 0
          %766 = vmatpush1.bf16.msra.mxu0 %v744
          %767 = vmatprep.subr.bf16.mxu0 0
          %768 = vmatpush1.bf16.msra.mxu0 %v743
          %769 = vmatprep.subr.bf16.mxu0 0
          %770 = vmatpush1.bf16.msra.mxu0 %v742
          %771 = vmatprep.subr.bf16.mxu0 0
          %772 = vmatpush1.bf16.msra.mxu0 %v741
          %773 = vmatprep.subr.bf16.mxu0 0
          %774 = vmatpush2.bf16.msra.mxu0 0
          %775 = vmatprep.subr.bf16.mxu0 0
          %776 = vmatpush2.bf16.msra.mxu0 0
          %777 = vmatprep.subr.bf16.mxu0 0
          %778 = vmatpush2.bf16.msra.mxu0 0
          %779 = vmatprep.subr.bf16.mxu0 0
          %780 = vmatpush2.bf16.msra.mxu0 0
          %781 = vmatprep.subr.bf16.mxu0 0
          %782 = vmatpush2.bf16.msra.mxu0 0
          %783 = vmatprep.subr.bf16.mxu0 0
          %784 = vmatpush2.bf16.msra.mxu0 0
          %785 = vmatprep.subr.bf16.mxu0 0
          %786 = vmatpush2.bf16.msra.mxu0 0
          %787 = vmatprep.subr.bf16.mxu0 0
          %788 = vmatpush2.bf16.msra.mxu0 0
          %789 = vmatprep.mubr.bf16.mxu0 0
          %790 = vmatmul.mubr.bf16.gmra.mxu0 %v689
          %v791 = vpop.f32.mrf.mxu0
          %v792 = vadd.f32 0.0, %v791
          %v793 = vpop.f32.mrf.mxu0
          %v794 = vpop.f32.mrf.mxu0
          %v795 = vadd.f32 0.0, %v794
          %v796 = vpop.f32.mrf.mxu0
          %797 = vmatprep.mubr.bf16.mxu0 0
          %798 = vmatmul.mubr.bf16.gmra.mxu0 %v690
          %v799 = vpop.f32.mrf.mxu0
          %v800 = vadd.f32 0.0, %v799
          %v801 = vpop.f32.mrf.mxu0
          %v802 = vpop.f32.mrf.mxu0
          %v803 = vadd.f32 0.0, %v802
          %v804 = vpop.f32.mrf.mxu0
          %805 = vmatprep.mubr.bf16.mxu0 0
          %806 = vmatmul.mubr.bf16.gmra.mxu0 %v691
          %v807 = vpop.f32.mrf.mxu0
          %v808 = vadd.f32 0.0, %v807
          %v809 = vpop.f32.mrf.mxu0
          %v810 = vpop.f32.mrf.mxu0
          %v811 = vadd.f32 0.0, %v810
          %v812 = vpop.f32.mrf.mxu0
          %813 = vmatprep.mubr.bf16.mxu0 0
          %814 = vmatmul.mubr.bf16.gmra.mxu0 %v692
          %v815 = vpop.f32.mrf.mxu0
          %v816 = vadd.f32 0.0, %v815
          %v817 = vpop.f32.mrf.mxu0
          %v818 = vpop.f32.mrf.mxu0
          %v819 = vadd.f32 0.0, %v818
          %v820 = vpop.f32.mrf.mxu0
          %821 = vdwg.mxu0
          %v822 = vpack.c.bf16 %v795, %v792
          %v823 = vpack.c.bf16 %v803, %v800
          %v824 = vpack.c.bf16 %v811, %v808
          %v825 = vpack.c.bf16 %v819, %v816
          %v830 = vunpack.c.l.b16 %v822
          %v831 = vunpack.c.h.b16 %v822
          %v832 = vunpack.c.l.b16 %v823
          %v833 = vunpack.c.h.b16 %v823
          %v834 = vunpack.c.l.b16 %v824
          %v835 = vunpack.c.h.b16 %v824
          %v836 = vunpack.c.l.b16 %v825
          %v837 = vunpack.c.h.b16 %v825
          %v838 = vpack.c.b16 %v830, %v830
          %v839 = vpack.c.b16 %v831, %v831
          %v840 = vpack.c.b16 %v832, %v832
          %v841 = vpack.c.b16 %v833, %v833
          %v842 = vpack.c.b16 %v834, %v834
          %v843 = vpack.c.b16 %v835, %v835
          %v844 = vpack.c.b16 %v836, %v836
          %v845 = vpack.c.b16 %v837, %v837
          %854 = vst [vmem:[%s327] sm:$0xf] %v838
          %855 = vst [vmem:[%s327 + $0x4] sm:$0xf] %v839
          %856 = vst [vmem:[%s327 + $0x8] sm:$0xf] %v840
          %857 = vst [vmem:[%s327 + $0xc] sm:$0xf] %v841
          %858 = vst [vmem:[%s327 + $0x10] sm:$0xf] %v842
          %859 = vst [vmem:[%s327 + $0x14] sm:$0xf] %v843
          %860 = vst [vmem:[%s327 + $0x18] sm:$0xf] %v844
          %861 = vst [vmem:[%s327 + $0x1c] sm:$0xf] %v845
        $region64: #{tpu_custom_call.1} parent=39 // pred_fallthru
          _
        %s862 = sand.u32 %s163, 1
        %s863 = scalar_lea.sflag [#allocation5], %s862
        %s864 = sand.u32 %s163, 1
        %s865 = smul.addr %s864, 32
        %s866 = scalar_lea.vmem [#allocation11], %s865
        // Predicated region
        $region65: #{tpu_custom_call.1} parent=39 // pred_check
          %p867 = pneg %p173
        $region66: #{tpu_custom_call.1} parent=39 // pred_check_branch
          %869 = sbr.rel (%p867) target = $region68
        $region67: #{tpu_custom_call.1} parent=39 // pred_region
          %s870 = smul.u32 8, %s30
          %s872 = ssub.s32 512, 512
          %873 = vsyncadd %s863, %s872
          %s874 = smul.addr %s870, 64
          %s875 = scalar_lea.hbm %s5, %s874
          %s876 = sshll.u32 %s866, 4
          %s877 = int_to_ptr.vmem [resolvable:$true] %s876
          %882 = dma.vmem_to_hbm [thread:$0]  %s877, 512, %s875, %s863, 64, 64, 4
        $region68: #{tpu_custom_call.1} parent=39 // pred_fallthru
          _
      $region40: #{tpu_custom_call.1} parent=5 // pred_fallthru
        _
      %p883 = scmp.le.s32.totalorder 2, %s21
      // Predicated region
      $region69: #{tpu_custom_call.1} parent=5 // pred_check
        %p884 = pneg %p883
      $region70: #{tpu_custom_call.1} parent=5 // pred_check_branch
        %886 = sbr.rel (%p884) target = $region72
      $region71: #{tpu_custom_call.1} parent=5 // pred_region
        %s887 = ssub.s32 %s21, 2
        // Predicated region
        $region73: #{tpu_custom_call.1} parent=71 // pred_check
          %p888 = pneg %p179
        $region74: #{tpu_custom_call.1} parent=71 // pred_check_branch
          %890 = sbr.rel (%p888) target = $region76
        $region75: #{tpu_custom_call.1} parent=71 // pred_region
          %s891 = sand.u32 %s164, 1
          %s892 = scalar_lea.sflag [#allocation5], %s891
          %s893 = sand.u32 %s164, 1
          %s894 = smul.addr %s893, 32
          %s895 = scalar_lea.vmem [#allocation11], %s894
          %896 = dma.done %s892, 512
        $region76: #{tpu_custom_call.1} parent=71 // pred_fallthru
          _
      $region72: #{tpu_custom_call.1} parent=5 // pred_fallthru
        _
    $region6: #{tpu_custom_call.1} parent=1 // loop_footer
      %s25 = sadd.s32 1, %s21
    $region7: #{tpu_custom_call.1} parent=1 // loop_footer_branch
      %20 = sbr.rel target = $region3
    $region8: #{tpu_custom_call.1} parent=1 // loop_exit
      _
    %897 = vsyncpa [#allocation4], 1
    %s898 = scalar_lea.sflag [#allocation4], 1
    %899 = vsyncpa %s898, 1
    %900 = vsyncpa [#allocation7], 1
    %s901 = scalar_lea.sflag [#allocation7], 1
    %902 = vsyncpa %s901, 1
    %903 = vsyncpa [#allocation10], 1
    %904 = vsyncpa [#allocation5], 1
    %s905 = scalar_lea.sflag [#allocation5], 1
    %906 = vsyncpa %s905, 1

</llo_original>
